<compile_context>
chip_gen: v5e
topology: v5e:2x2
jax: 0.10.0
libtpu: 0.0.40
codegen_flags: <defaults>
</compile_context>

<pallas_src>
import jax
import jax.numpy as jnp
from jax.experimental import pallas as pl
from jax.experimental.pallas import tpu as pltpu


def _sem_decoder_kernel(m_ref, bmz_ref, bout_ref, z_ref, matz_ref, out_ref):
    # m_ref   : (DZ, DZ)  kron(adj_inv^T, I_Z), resident across all grid steps
    # bmz_ref : (1, DZ)   bias row for mat_z  =  rowsum(adj_inv)       * Wa
    # bout_ref: (1, DZ)   bias row for out    = (rowsum(adj_inv) - 1)  * Wa
    # z_ref   : (TB, DZ)  current lane-dense tile of flattened input_z
    core = jnp.dot(z_ref[...], m_ref[...],
                   preferred_element_type=jnp.float32)        # (TB, DZ) on MXU
    matz_ref[...] = (core + bmz_ref[...]).astype(matz_ref.dtype)
    out_ref[...] = (core + bout_ref[...]).astype(out_ref.dtype)


def sem_decoder_forward(inputs, input_z, n_in_node, rel_rec, rel_send,
                        origin_A, adj_A_tilt, Wa):
    """Pallas implementation of SEMDecoder.forward.

    input_z : (B, D, Z) float32
    origin_A: (D, D)    float32
    Wa      : (Z,)      float32
    Returns (mat_z, out - Wa, adj_A_tilt), matching the PyTorch module.
    (inputs, n_in_node, rel_rec, rel_send are unused, as in the reference.)
    """
    B, D, Z = input_z.shape
    DZ = D * Z

    # preprocess_adj_new1: inv(I - A^T)   (torch uses float64; f32 here)
    adj_inv = jnp.linalg.inv(jnp.eye(D, dtype=jnp.float32)
                             - origin_A.astype(jnp.float32).T)
    wa = Wa.reshape(Z).astype(jnp.float32)

    # Lane-dense operands (all reshapes are free row-major views).
    z_flat = input_z.astype(jnp.float32).reshape(B, DZ)
    kron_m = jnp.kron(adj_inv.T, jnp.eye(Z, dtype=jnp.float32))   # (DZ, DZ)
    rowsum = jnp.sum(adj_inv, axis=1)                             # (D,)
    bias_mz = (rowsum[:, None] * wa[None, :]).reshape(1, DZ)
    bias_out = ((rowsum - 1.0)[:, None] * wa[None, :]).reshape(1, DZ)

    # Batch tile: ~1 MiB per block.  Double-buffered footprint is
    # 3 tensors x 2 buffers x 1 MiB + kron, comfortably under the default
    # scoped-VMEM budget on every generation, while large enough to sit near
    # the HBM roofline and amortize the ~0.35 us per-grid-step overhead.
    row_bytes = DZ * 4
    tb = max(1, (1 << 20) // row_bytes)
    if tb >= B:
        TB = B                       # single block == full array dims (legal)
    else:
        TB = max(8, (tb // 8) * 8)   # sublane-aligned partial blocks
    grid = (pl.cdiv(B, TB),)

    grid_spec = pltpu.PrefetchScalarGridSpec(
        num_scalar_prefetch=0,
        grid=grid,
        in_specs=[
            pl.BlockSpec((DZ, DZ), lambda b: (0, 0)),   # kron matrix (resident)
            pl.BlockSpec((1, DZ), lambda b: (0, 0)),    # bias_mz   (resident)
            pl.BlockSpec((1, DZ), lambda b: (0, 0)),    # bias_out  (resident)
            pl.BlockSpec((TB, DZ), lambda b: (b, 0)),   # input_z tile
        ],
        out_specs=[
            pl.BlockSpec((TB, DZ), lambda b: (b, 0)),   # mat_z tile
            pl.BlockSpec((TB, DZ), lambda b: (b, 0)),   # (out - Wa) tile
        ],
    )

    mat_z_flat, out_flat = pl.pallas_call(
        _sem_decoder_kernel,
        out_shape=(
            jax.ShapeDtypeStruct((B, DZ), jnp.float32),
            jax.ShapeDtypeStruct((B, DZ), jnp.float32),
        ),
        grid_spec=grid_spec,
        compiler_params=pltpu.CompilerParams(
            dimension_semantics=("parallel",)),
        cost_estimate=pl.CostEstimate(
            flops=2 * B * DZ * DZ,
            bytes_accessed=(3 * B * DZ + DZ * DZ + 2 * DZ) * 4,
            transcendentals=0),
    )(kron_m, bias_mz, bias_out, z_flat)

    mat_z = mat_z_flat.reshape(B, D, Z)
    out_minus_wa = out_flat.reshape(B, D, Z)
    return mat_z, out_minus_wa, adj_A_tilt


if __name__ == "__main__":
    key = jax.random.PRNGKey(0)
    k1, k2, k3, k4 = jax.random.split(key, 4)

    B = 2          # batch_size
    D = 8          # data_variable_size (number of graph nodes)
    Z = 32         # n_out / latent dim per node

    input_z = jax.random.normal(k1, (B, D, Z), dtype=jnp.float32)
    # Small-magnitude adjacency so (I - A^T) is well-conditioned.
    origin_A = 0.1 * jax.random.normal(k2, (D, D), dtype=jnp.float32)
    adj_A_tilt = jax.random.normal(k3, (D, D), dtype=jnp.float32)
    Wa = 0.5 * jax.random.normal(k4, (Z,), dtype=jnp.float32)

    # Unused-by-forward args (kept to mirror the PyTorch signature).
    inputs = jnp.zeros((B, D, 1), dtype=jnp.float32)
    rel_rec = jnp.zeros((D * (D - 1), D), dtype=jnp.float32)
    rel_send = jnp.zeros((D * (D - 1), D), dtype=jnp.float32)

    mat_z, out_mw, adj_tilt_out = sem_decoder_forward(
        inputs, input_z, 1, rel_rec, rel_send, origin_A, adj_A_tilt, Wa)
    jax.block_until_ready((mat_z, out_mw, adj_tilt_out))

    # Reference check in plain JAX.
    adj_inv_ref = jnp.linalg.inv(jnp.eye(D) - origin_A.T)
    mat_z_ref = jnp.einsum("ij,bjz->biz", adj_inv_ref, input_z + Wa[None, None, :])
    out_ref = mat_z_ref - Wa[None, None, :]
    assert jnp.allclose(mat_z, mat_z_ref, atol=1e-4, rtol=1e-4)
    assert jnp.allclose(out_mw, out_ref, atol=1e-4, rtol=1e-4)
    assert jnp.array_equal(adj_tilt_out, adj_A_tilt)

    print("KERNEL_OK")
</pallas_src>

<mosaic_0001>
module attributes {stable_mosaic.version = 11 : i64} {
  func.func @_sem_decoder_kernel(%arg0: i32, %arg1: memref<256x256xf32, #tpu.memory_space<vmem>>, %arg2: memref<1x256xf32, #tpu.memory_space<vmem>>, %arg3: memref<1x256xf32, #tpu.memory_space<vmem>>, %arg4: memref<2x256xf32, #tpu.memory_space<vmem>>, %arg5: memref<2x256xf32, #tpu.memory_space<vmem>>, %arg6: memref<2x256xf32, #tpu.memory_space<vmem>>) attributes {dimension_semantics = [#tpu.dimension_semantics<parallel>], iteration_bounds = array<i64: 1>, scalar_prefetch = 0 : i64, scratch_operands = 0 : i64, tpu.core_type = #tpu.core_type<tc>, window_params = [{pipeline_mode = #tpu.pipeline_mode<synchronous>, transform_indices = @transform_0, window_bounds = array<i64: 256, 256>}, {pipeline_mode = #tpu.pipeline_mode<synchronous>, transform_indices = @transform_1, window_bounds = array<i64: 1, 256>}, {pipeline_mode = #tpu.pipeline_mode<synchronous>, transform_indices = @transform_2, window_bounds = array<i64: 1, 256>}, {transform_indices = @transform_3, window_bounds = array<i64: 2, 256>}, {transform_indices = @transform_4, window_bounds = array<i64: 2, 256>}, {transform_indices = @transform_5, window_bounds = array<i64: 2, 256>}]} {
    %c0 = arith.constant 0 : index
    %c0_0 = arith.constant 0 : index
    %0 = vector.load %arg4[%c0, %c0_0] : memref<2x256xf32, #tpu.memory_space<vmem>>, vector<2x256xf32>
    %c0_1 = arith.constant 0 : index
    %c0_2 = arith.constant 0 : index
    %1 = vector.load %arg1[%c0_1, %c0_2] : memref<256x256xf32, #tpu.memory_space<vmem>>, vector<256x256xf32>
    %cst = arith.constant dense<0.000000e+00> : vector<2x256xf32>
    %2 = tpu.matmul %0, %1, %cst {dimension_numbers = #tpu.dot_dimension_numbers<[1], [0], [0], [1], [0, 0, 1, 1], [], []>} : vector<2x256xf32>, vector<256x256xf32>, vector<2x256xf32> -> vector<2x256xf32>
    %c0_3 = arith.constant 0 : index
    %c0_4 = arith.constant 0 : index
    %3 = vector.load %arg2[%c0_3, %c0_4] : memref<1x256xf32, #tpu.memory_space<vmem>>, vector<1x256xf32>
    %4 = vector.broadcast %3 : vector<1x256xf32> to vector<2x256xf32>
    %5 = arith.addf %2, %4 : vector<2x256xf32>
    %c0_5 = arith.constant 0 : index
    %c0_6 = arith.constant 0 : index
    %6 = vector.load %arg5[%c0_5, %c0_6] : memref<2x256xf32, #tpu.memory_space<vmem>>, vector<2x256xf32>
    tpu.vector_store %arg5[%c0_5, %c0_6], %5 {strides = array<i32>} : memref<2x256xf32, #tpu.memory_space<vmem>>, vector<2x256xf32>,
    %c0_7 = arith.constant 0 : index
    %c0_8 = arith.constant 0 : index
    %7 = vector.load %arg3[%c0_7, %c0_8] : memref<1x256xf32, #tpu.memory_space<vmem>>, vector<1x256xf32>
    %8 = vector.broadcast %7 : vector<1x256xf32> to vector<2x256xf32>
    %9 = arith.addf %2, %8 : vector<2x256xf32>
    %c0_9 = arith.constant 0 : index
    %c0_10 = arith.constant 0 : index
    %10 = vector.load %arg6[%c0_9, %c0_10] : memref<2x256xf32, #tpu.memory_space<vmem>>, vector<2x256xf32>
    tpu.vector_store %arg6[%c0_9, %c0_10], %9 {strides = array<i32>} : memref<2x256xf32, #tpu.memory_space<vmem>>, vector<2x256xf32>,
    return
  }
  func.func @transform_0(%arg0: i32) -> (i32, i32) {
    %c0_i32 = arith.constant 0 : i32
    %c0_i32_0 = arith.constant 0 : i32
    %c0_i32_1 = arith.constant 0 : i32
    return %c0_i32, %c0_i32_0 : i32, i32
  }
  func.func @transform_1(%arg0: i32) -> (i32, i32) {
    %c0_i32 = arith.constant 0 : i32
    %c0_i32_0 = arith.constant 0 : i32
    %c0_i32_1 = arith.constant 0 : i32
    return %c0_i32, %c0_i32_0 : i32, i32
  }
  func.func @transform_2(%arg0: i32) -> (i32, i32) {
    %c0_i32 = arith.constant 0 : i32
    %c0_i32_0 = arith.constant 0 : i32
    %c0_i32_1 = arith.constant 0 : i32
    return %c0_i32, %c0_i32_0 : i32, i32
  }
  func.func @transform_3(%arg0: i32) -> (i32, i32) {
    %c0_i32 = arith.constant 0 : i32
    %c0_i32_0 = arith.constant 0 : i32
    return %arg0, %c0_i32 : i32, i32
  }
  func.func @transform_4(%arg0: i32) -> (i32, i32) {
    %c0_i32 = arith.constant 0 : i32
    %c0_i32_0 = arith.constant 0 : i32
    return %arg0, %c0_i32 : i32, i32
  }
  func.func @transform_5(%arg0: i32) -> (i32, i32) {
    %c0_i32 = arith.constant 0 : i32
    %c0_i32_0 = arith.constant 0 : i32
    return %arg0, %c0_i32 : i32, i32
  }
}

</mosaic_0001>

<llo_original>
// kernel: tpu_custom_call.1
$region0: #{tpu_custom_call.1}
  #allocation0 [shape = 'u32[]', space=smem, size = 0x4, offset = 0x4, fixed_abs, tag = 'smem constant byte address 0x4 - core index']
  #allocation1 [shape = 'u32[72,128]{1,0:T(1,128)}', space=vmem, size = 0x9000, scoped, tag = 'internal scratch']
  %s0 = inlined_call_operand.hbm [shape: f32[256,256], index: 0, kind: input, shape index: {}]
  %s1 = inlined_call_operand.hbm [shape: f32[1,256], index: 1, kind: input, shape index: {}]
  %s2 = inlined_call_operand.hbm [shape: f32[1,256], index: 2, kind: input, shape index: {}]
  %s3 = inlined_call_operand.hbm [shape: f32[2,256], index: 3, kind: input, shape index: {}]
  %s4 = inlined_call_operand.hbm [shape: f32[2,256], index: 4, kind: output, shape index: {0}]
  %s5 = inlined_call_operand.hbm [shape: f32[2,256], index: 5, kind: output, shape index: {1}]
  %6 = xla_tuple %s4, %s5
  %s7 = sld [smem:[#allocation0]]
  $region50: #{tpu_custom_call.1} parent=0
    _
  %s9 = ssub.s32 1, %s7
  %s10 = scalar_select 0, %s9, %s7
  $region1: #{tpu_custom_call.1} parent=0
    #allocation2 [shape = 'u8[262144]{0}', space=vmem, size = 0x40000, scoped, tag = 'input window, operand 0, single buffered']
    #allocation3 [shape = 's32[1]{0}', space=sflag, size = 0x4, scoped, tag = 'scoped memory for tpu_custom_call.1']
    #allocation4 [shape = 's32[1]{0}', space=sflag, size = 0x4, scoped, tag = 'scoped memory for tpu_custom_call.1']
    #allocation5 [shape = 'u8[1024]{0}', space=vmem, size = 0x400, scoped, tag = 'input window, operand 1, single buffered']
    #allocation6 [shape = 's32[1]{0}', space=sflag, size = 0x4, scoped, tag = 'scoped memory for tpu_custom_call.1']
    #allocation7 [shape = 'u8[1024]{0}', space=vmem, size = 0x400, scoped, tag = 'input window, operand 2, single buffered']
    #allocation8 [shape = 'u8[2048]{0}', space=vmem, size = 0x800, scoped, tag = 'input window, operand 3, single buffered']
    #allocation9 [shape = 's32[1]{0}', space=sflag, size = 0x4, scoped, tag = 'scoped memory for tpu_custom_call.1']
    #allocation10 [shape = 'u8[2048]{0}', space=vmem, size = 0x800, scoped, tag = 'output window, operand 0, single buffered']
    #allocation11 [shape = 'u8[2048]{0}', space=vmem, size = 0x800, scoped, tag = 'output window, operand 1, single buffered']
    #allocation12 [shape = 's32[1]{0}', space=sflag, size = 0x4, scoped, tag = 'scoped memory for tpu_custom_call.1']
    %11 = vsyncpa [#allocation3], 0
    %12 = vsyncpa [#allocation6], 0
    %13 = vsyncpa [#allocation9], 0
    %14 = vsyncpa [#allocation4], 0
    %15 = vsyncpa [#allocation12], 0
    // Predicated region
    $region2: #{tpu_custom_call.1} parent=1 // pred_check
      _
    $region3: #{tpu_custom_call.1} parent=1 // pred_check_branch
      %17 = sbr.rel (0) target = $region5
    $region4: #{tpu_custom_call.1} parent=1 // pred_region
      %19 = vsyncadd [#allocation3], 0
      %s20 = sshll.u32 %s0, 4
      %s21 = int_to_ptr.hbm [resolvable:$true] %s20
      %s22 = sshll.u32 [#allocation2], 4
      %s23 = int_to_ptr.vmem [resolvable:$true] %s22
      %28 = dma.hbm_to_vmem [thread:$0]  %s21, 8192, %s23, [#allocation3], 256, 256, 16
    $region5: #{tpu_custom_call.1} parent=1 // pred_fallthru
      _
    // Predicated region
    $region6: #{tpu_custom_call.1} parent=1 // pred_check
      _
    $region7: #{tpu_custom_call.1} parent=1 // pred_check_branch
      %30 = sbr.rel (0) target = $region9
    $region8: #{tpu_custom_call.1} parent=1 // pred_region
      %32 = vsyncadd [#allocation6], 0
      %s34 = sshll.u32 %s1, 4
      %s35 = int_to_ptr.hbm [resolvable:$true] %s34
      %s36 = sshll.u32 [#allocation5], 4
      %s37 = int_to_ptr.vmem [resolvable:$true] %s36
      %39 = dma.hbm_to_vmem [thread:$0]  %s35, 32, %s37, [#allocation6]
    $region9: #{tpu_custom_call.1} parent=1 // pred_fallthru
      _
    // Predicated region
    $region10: #{tpu_custom_call.1} parent=1 // pred_check
      _
    $region11: #{tpu_custom_call.1} parent=1 // pred_check_branch
      %41 = sbr.rel (0) target = $region13
    $region12: #{tpu_custom_call.1} parent=1 // pred_region
      %43 = vsyncadd [#allocation6], 0
      %s45 = sshll.u32 %s2, 4
      %s46 = int_to_ptr.hbm [resolvable:$true] %s45
      %s47 = sshll.u32 [#allocation7], 4
      %s48 = int_to_ptr.vmem [resolvable:$true] %s47
      %50 = dma.hbm_to_vmem [thread:$0]  %s46, 32, %s48, [#allocation6]
    $region13: #{tpu_custom_call.1} parent=1 // pred_fallthru
      _
    // Predicated region
    $region14: #{tpu_custom_call.1} parent=1 // pred_check
      _
    $region15: #{tpu_custom_call.1} parent=1 // pred_check_branch
      %52 = sbr.rel (0) target = $region17
    $region16: #{tpu_custom_call.1} parent=1 // pred_region
      %54 = vsyncadd [#allocation9], 0
      %s56 = sshll.u32 %s3, 4
      %s57 = int_to_ptr.hbm [resolvable:$true] %s56
      %s58 = sshll.u32 [#allocation8], 4
      %s59 = int_to_ptr.vmem [resolvable:$true] %s58
      %61 = dma.hbm_to_vmem [thread:$0]  %s57, 64, %s59, [#allocation9]
    $region17: #{tpu_custom_call.1} parent=1 // pred_fallthru
      _
    // Predicated region
    $region18: #{tpu_custom_call.1} parent=1 // pred_check
      _
    $region19: #{tpu_custom_call.1} parent=1 // pred_check_branch
      %63 = sbr.rel (0) target = $region21
    $region20: #{tpu_custom_call.1} parent=1 // pred_region
      %65 = dma.done [#allocation3], 8192
    $region21: #{tpu_custom_call.1} parent=1 // pred_fallthru
      _
    // Predicated region
    $region22: #{tpu_custom_call.1} parent=1 // pred_check
      _
    $region23: #{tpu_custom_call.1} parent=1 // pred_check_branch
      %67 = sbr.rel (0) target = $region25
    $region24: #{tpu_custom_call.1} parent=1 // pred_region
      %69 = dma.done [#allocation6], 32
    $region25: #{tpu_custom_call.1} parent=1 // pred_fallthru
      _
    // Predicated region
    $region26: #{tpu_custom_call.1} parent=1 // pred_check
      _
    $region27: #{tpu_custom_call.1} parent=1 // pred_check_branch
      %71 = sbr.rel (0) target = $region29
    $region28: #{tpu_custom_call.1} parent=1 // pred_region
      %73 = dma.done [#allocation6], 32
    $region29: #{tpu_custom_call.1} parent=1 // pred_fallthru
      _
    // Predicated region
    $region30: #{tpu_custom_call.1} parent=1 // pred_check
      _
    $region31: #{tpu_custom_call.1} parent=1 // pred_check_branch
      %75 = sbr.rel (0) target = $region33
    $region32: #{tpu_custom_call.1} parent=1 // pred_region
      %77 = dma.done [#allocation9], 64
    $region33: #{tpu_custom_call.1} parent=1 // pred_fallthru
      _
    %v78 = vld [vmem:[#allocation8] sm:$0xf]
    %v79 = vld [vmem:[#allocation2] sm:$0xff]
    %v80 = vld [vmem:[#allocation2 + $0x8] sm:$0xff]
    %v81 = vld [vmem:[#allocation2 + $0x10] sm:$0xff]
    %v82 = vld [vmem:[#allocation2 + $0x18] sm:$0xff]
    %v83 = vld [vmem:[#allocation2 + $0x20] sm:$0xff]
    %v84 = vld [vmem:[#allocation2 + $0x28] sm:$0xff]
    %v85 = vld [vmem:[#allocation2 + $0x30] sm:$0xff]
    %v86 = vld [vmem:[#allocation2 + $0x38] sm:$0xff]
    %v87 = vld [vmem:[#allocation2 + $0x40] sm:$0xff]
    %v88 = vld [vmem:[#allocation2 + $0x48] sm:$0xff]
    %v89 = vld [vmem:[#allocation2 + $0x50] sm:$0xff]
    %v90 = vld [vmem:[#allocation2 + $0x58] sm:$0xff]
    %v91 = vld [vmem:[#allocation2 + $0x60] sm:$0xff]
    %v92 = vld [vmem:[#allocation2 + $0x68] sm:$0xff]
    %v93 = vld [vmem:[#allocation2 + $0x70] sm:$0xff]
    %v94 = vld [vmem:[#allocation2 + $0x78] sm:$0xff]
    %v95 = vld [vmem:[#allocation2 + $0x80] sm:$0xff]
    %v96 = vld [vmem:[#allocation2 + $0x88] sm:$0xff]
    %v97 = vld [vmem:[#allocation2 + $0x90] sm:$0xff]
    %v98 = vld [vmem:[#allocation2 + $0x98] sm:$0xff]
    %v99 = vld [vmem:[#allocation2 + $0xa0] sm:$0xff]
    %v100 = vld [vmem:[#allocation2 + $0xa8] sm:$0xff]
    %v101 = vld [vmem:[#allocation2 + $0xb0] sm:$0xff]
    %v102 = vld [vmem:[#allocation2 + $0xb8] sm:$0xff]
    %v103 = vld [vmem:[#allocation2 + $0xc0] sm:$0xff]
    %v104 = vld [vmem:[#allocation2 + $0xc8] sm:$0xff]
    %v105 = vld [vmem:[#allocation2 + $0xd0] sm:$0xff]
    %v106 = vld [vmem:[#allocation2 + $0xd8] sm:$0xff]
    %v107 = vld [vmem:[#allocation2 + $0xe0] sm:$0xff]
    %v108 = vld [vmem:[#allocation2 + $0xe8] sm:$0xff]
    %v109 = vld [vmem:[#allocation2 + $0xf0] sm:$0xff]
    %v110 = vld [vmem:[#allocation2 + $0xf8] sm:$0xff]
    %v111 = vld [vmem:[#allocation2 + $0x100] sm:$0xff]
    %v112 = vld [vmem:[#allocation2 + $0x108] sm:$0xff]
    %v113 = vld [vmem:[#allocation2 + $0x110] sm:$0xff]
    %v114 = vld [vmem:[#allocation2 + $0x118] sm:$0xff]
    %v115 = vld [vmem:[#allocation2 + $0x120] sm:$0xff]
    %v116 = vld [vmem:[#allocation2 + $0x128] sm:$0xff]
    %v117 = vld [vmem:[#allocation2 + $0x130] sm:$0xff]
    %v118 = vld [vmem:[#allocation2 + $0x138] sm:$0xff]
    %v119 = vld [vmem:[#allocation2 + $0x140] sm:$0xff]
    %v120 = vld [vmem:[#allocation2 + $0x148] sm:$0xff]
    %v121 = vld [vmem:[#allocation2 + $0x150] sm:$0xff]
    %v122 = vld [vmem:[#allocation2 + $0x158] sm:$0xff]
    %v123 = vld [vmem:[#allocation2 + $0x160] sm:$0xff]
    %v124 = vld [vmem:[#allocation2 + $0x168] sm:$0xff]
    %v125 = vld [vmem:[#allocation2 + $0x170] sm:$0xff]
    %v126 = vld [vmem:[#allocation2 + $0x178] sm:$0xff]
    %v127 = vld [vmem:[#allocation2 + $0x180] sm:$0xff]
    %v128 = vld [vmem:[#allocation2 + $0x188] sm:$0xff]
    %v129 = vld [vmem:[#allocation2 + $0x190] sm:$0xff]
    %v130 = vld [vmem:[#allocation2 + $0x198] sm:$0xff]
    %v131 = vld [vmem:[#allocation2 + $0x1a0] sm:$0xff]
    %v132 = vld [vmem:[#allocation2 + $0x1a8] sm:$0xff]
    %v133 = vld [vmem:[#allocation2 + $0x1b0] sm:$0xff]
    %v134 = vld [vmem:[#allocation2 + $0x1b8] sm:$0xff]
    %v135 = vld [vmem:[#allocation2 + $0x1c0] sm:$0xff]
    %v136 = vld [vmem:[#allocation2 + $0x1c8] sm:$0xff]
    %v137 = vld [vmem:[#allocation2 + $0x1d0] sm:$0xff]
    %v138 = vld [vmem:[#allocation2 + $0x1d8] sm:$0xff]
    %v139 = vld [vmem:[#allocation2 + $0x1e0] sm:$0xff]
    %v140 = vld [vmem:[#allocation2 + $0x1e8] sm:$0xff]
    %v141 = vld [vmem:[#allocation2 + $0x1f0] sm:$0xff]
    %v142 = vld [vmem:[#allocation2 + $0x1f8] sm:$0xff]
    %144 = vst [vmem:[#allocation1] ss:$4 sm:$0xff] %v78
    %v145 = vld.sshfl [vmem:[#allocation1] sm:$0xff pattern:$0x73625140]
    %v146 = vld.sshfl [vmem:[#allocation1 + $0x8] sm:$0xff pattern:$0x73625140]
    %149 = vmatpush.msra.mxu0 %v109
    %150 = vmatpush.msra.mxu0 %v107
    %151 = vmatpush.msra.mxu0 %v105
    %152 = vmatpush.msra.mxu0 %v103
    %153 = vmatpush.msra.mxu0 %v101
    %154 = vmatpush.msra.mxu0 %v99
    %155 = vmatpush.msra.mxu0 %v97
    %156 = vmatpush.msra.mxu0 %v95
    %157 = vmatpush.msra.mxu0 %v93
    %158 = vmatpush.msra.mxu0 %v91
    %159 = vmatpush.msra.mxu0 %v89
    %160 = vmatpush.msra.mxu0 %v87
    %161 = vmatpush.msra.mxu0 %v85
    %162 = vmatpush.msra.mxu0 %v83
    %163 = vmatpush.msra.mxu0 %v81
    %164 = vmatpush.msra.mxu0 %v79
    %165 = vmatmul.f32.gmra.mxu0 %v145
    %v166 = vpop.f32.mrf.mxu0
    %v167 = vadd.f32 0.0, %v166
    %168 = vdwg.mxu0
    %169 = vmatpush.msra.mxu0 %v141
    %170 = vmatpush.msra.mxu0 %v139
    %171 = vmatpush.msra.mxu0 %v137
    %172 = vmatpush.msra.mxu0 %v135
    %173 = vmatpush.msra.mxu0 %v133
    %174 = vmatpush.msra.mxu0 %v131
    %175 = vmatpush.msra.mxu0 %v129
    %176 = vmatpush.msra.mxu0 %v127
    %177 = vmatpush.msra.mxu0 %v125
    %178 = vmatpush.msra.mxu0 %v123
    %179 = vmatpush.msra.mxu0 %v121
    %180 = vmatpush.msra.mxu0 %v119
    %181 = vmatpush.msra.mxu0 %v117
    %182 = vmatpush.msra.mxu0 %v115
    %183 = vmatpush.msra.mxu0 %v113
    %184 = vmatpush.msra.mxu0 %v111
    %185 = vmatmul.f32.gmra.mxu0 %v146
    %v186 = vpop.f32.mrf.mxu0
    %v187 = vadd.f32 %v167, %v186
    %188 = vdwg.mxu0
    %189 = vmatpush.msra.mxu0 %v110
    %190 = vmatpush.msra.mxu0 %v108
    %191 = vmatpush.msra.mxu0 %v106
    %192 = vmatpush.msra.mxu0 %v104
    %193 = vmatpush.msra.mxu0 %v102
    %194 = vmatpush.msra.mxu0 %v100
    %195 = vmatpush.msra.mxu0 %v98
    %196 = vmatpush.msra.mxu0 %v96
    %197 = vmatpush.msra.mxu0 %v94
    %198 = vmatpush.msra.mxu0 %v92
    %199 = vmatpush.msra.mxu0 %v90
    %200 = vmatpush.msra.mxu0 %v88
    %201 = vmatpush.msra.mxu0 %v86
    %202 = vmatpush.msra.mxu0 %v84
    %203 = vmatpush.msra.mxu0 %v82
    %204 = vmatpush.msra.mxu0 %v80
    %205 = vmatmul.f32.gmra.mxu0 %v145
    %v206 = vpop.f32.mrf.mxu0
    %v207 = vadd.f32 0.0, %v206
    %208 = vdwg.mxu0
    %209 = vmatpush.msra.mxu0 %v142
    %210 = vmatpush.msra.mxu0 %v140
    %211 = vmatpush.msra.mxu0 %v138
    %212 = vmatpush.msra.mxu0 %v136
    %213 = vmatpush.msra.mxu0 %v134
    %214 = vmatpush.msra.mxu0 %v132
    %215 = vmatpush.msra.mxu0 %v130
    %216 = vmatpush.msra.mxu0 %v128
    %217 = vmatpush.msra.mxu0 %v126
    %218 = vmatpush.msra.mxu0 %v124
    %219 = vmatpush.msra.mxu0 %v122
    %220 = vmatpush.msra.mxu0 %v120
    %221 = vmatpush.msra.mxu0 %v118
    %222 = vmatpush.msra.mxu0 %v116
    %223 = vmatpush.msra.mxu0 %v114
    %224 = vmatpush.msra.mxu0 %v112
    %225 = vmatmul.f32.gmra.mxu0 %v146
    %v226 = vpop.f32.mrf.mxu0
    %v227 = vadd.f32 %v207, %v226
    %228 = vdwg.mxu0
    %v229 = vld [vmem:[#allocation5] sm:$0x3]
    %v231 = vperm.slane %v229, 0
    %v232 = vperm.slane %v229, 1
    %v235 = vadd.f32 %v187, %v231
    %v236 = vadd.f32 %v227, %v232
    %v239 = vrot.slane %v236, 6
    %vm240 = vcmask 1041408
    %v241 = vsel %vm240, %v235, %v239
    %243 = vst [vmem:[#allocation10] sm:$0xf] %v241
    %v244 = vld [vmem:[#allocation7] sm:$0x3]
    %v246 = vperm.slane %v244, 0
    %v247 = vperm.slane %v244, 1
    %v250 = vadd.f32 %v187, %v246
    %v251 = vadd.f32 %v227, %v247
    %v254 = vrot.slane %v251, 6
    %v255 = vsel %vm240, %v250, %v254
    %257 = vst [vmem:[#allocation11] sm:$0xf] %v255
    // Predicated region
    $region34: #{tpu_custom_call.1} parent=1 // pred_check
      _
    $region35: #{tpu_custom_call.1} parent=1 // pred_check_branch
      %259 = sbr.rel (0) target = $region37
    $region36: #{tpu_custom_call.1} parent=1 // pred_region
      %261 = vsyncadd [#allocation4], 0
      %s263 = sshll.u32 [#allocation10], 4
      %s264 = int_to_ptr.vmem [resolvable:$true] %s263
      %s265 = sshll.u32 %s4, 4
      %s266 = int_to_ptr.hbm [resolvable:$true] %s265
      %268 = dma.vmem_to_hbm [thread:$0]  %s264, 64, %s266, [#allocation4]
    $region37: #{tpu_custom_call.1} parent=1 // pred_fallthru
      _
    // Predicated region
    $region38: #{tpu_custom_call.1} parent=1 // pred_check
      _
    $region39: #{tpu_custom_call.1} parent=1 // pred_check_branch
      %270 = sbr.rel (0) target = $region41
    $region40: #{tpu_custom_call.1} parent=1 // pred_region
      %272 = vsyncadd [#allocation12], 0
      %s274 = sshll.u32 [#allocation11], 4
      %s275 = int_to_ptr.vmem [resolvable:$true] %s274
      %s276 = sshll.u32 %s5, 4
      %s277 = int_to_ptr.hbm [resolvable:$true] %s276
      %279 = dma.vmem_to_hbm [thread:$0]  %s275, 64, %s277, [#allocation12]
    $region41: #{tpu_custom_call.1} parent=1 // pred_fallthru
      _
    // Predicated region
    $region42: #{tpu_custom_call.1} parent=1 // pred_check
      _
    $region43: #{tpu_custom_call.1} parent=1 // pred_check_branch
      %281 = sbr.rel (0) target = $region45
    $region44: #{tpu_custom_call.1} parent=1 // pred_region
      %283 = dma.done [#allocation4], 64
    $region45: #{tpu_custom_call.1} parent=1 // pred_fallthru
      _
    // Predicated region
    $region46: #{tpu_custom_call.1} parent=1 // pred_check
      _
    $region47: #{tpu_custom_call.1} parent=1 // pred_check_branch
      %285 = sbr.rel (0) target = $region49
    $region48: #{tpu_custom_call.1} parent=1 // pred_region
      %287 = dma.done [#allocation12], 64
    $region49: #{tpu_custom_call.1} parent=1 // pred_fallthru
      _
    %288 = vsyncpa [#allocation3], 1
    %289 = vsyncpa [#allocation6], 1
    %290 = vsyncpa [#allocation9], 1
    %291 = vsyncpa [#allocation4], 1
    %292 = vsyncpa [#allocation12], 1

</llo_original>
